<compile_context>
chip_gen: v7x
topology: tpu7x:2x2x1
jax: 0.10.0
libtpu: 0.0.40
codegen_flags: <defaults>
</compile_context>

<pallas_src>
import jax
import jax.numpy as jnp
from jax.experimental import pallas as pl
from jax.experimental.pallas import tpu as pltpu

# ----------------------------- configuration -----------------------------
B = 2          # batch
C = 4          # input channels
H = W = 16     # spatial
K = 10         # classifier classes
MAP_CHANNELS_START = 1
MAP_CHANNELS = 2

D = C * H * W                          # 1024, flattened input dim
SL_START = MAP_CHANNELS_START * H * W  # flattened start of saliency slice
SL_SIZE = MAP_CHANNELS * H * W         # flattened size of saliency slice (512)


# ------------------------------ Pallas kernel -----------------------------
def _cd_kernel(x_ref, wc_ref, bc_ref, meff_ref, out_ref):
    """Fused C_D forward for one batch tile.

    x_ref    : (TB, D)    flattened NCHW input tile (streamed per grid step)
    wc_ref   : (D, K)     classifier weight (VMEM-resident across grid steps)
    bc_ref   : (1, K)     classifier bias
    meff_ref : (1, K)     fused saliency->detector vector:
                          (Wc[SL,:].T @ Wd)[:,0] - (Wc[SL,:].T @ Wd)[:,1]
                          + (bd[0] - bd[1])
    out_ref  : (TB, K+1)  cat([classifier_output, N_1], dim=1)
    """
    x = x_ref[...]                                                     # (TB, D)

    # ---- classifier forward (MXU) ----
    logits = jnp.dot(x, wc_ref[...],
                     preferred_element_type=jnp.float32) + bc_ref[...]  # (TB, K)

    # ---- torch.max(classifier_output, 1)[0] and its (first) argmax ----
    maxc = jnp.max(logits, axis=1, keepdims=True)                       # (TB, 1)
    iota = jax.lax.broadcasted_iota(jnp.int32, logits.shape, 1)         # (TB, K)
    first_idx = jnp.min(jnp.where(logits == maxc, iota, K),
                        axis=1, keepdims=True)                          # (TB, 1)
    onehot = (iota == first_idx).astype(jnp.float32)                    # (TB, K)

    # ---- saliency -> channel-slice -> detector, collapsed algebraically ----
    # det[:,0]-det[:,1] = onehot @ m_diff + (bd0-bd1); since sum(onehot)==1 the
    # bias difference is folded into m_eff, so one VPU multiply + lane reduce.
    is_adv = jnp.sum(onehot * meff_ref[...], axis=1, keepdims=True)     # (TB, 1)

    # ---- N_1 and single concatenated output store ----
    n1 = (is_adv + 1.0) * maxc                                          # (TB, 1)
    out_ref[...] = jnp.concatenate([logits, n1], axis=1)                # (TB, K+1)


# ------------------------------- wrapper -----------------------------------
@jax.jit
def cd_forward(x_nchw, wc, bc, wd, bd):
    """Flatten NCHW input, fuse the detector head, call the Pallas kernel."""
    b = x_nchw.shape[0]
    x_flat = x_nchw.reshape(b, -1).astype(jnp.float32)                  # (B, D)

    # Fold the whole saliency->detector path into a (K,) vector, once.
    m = jnp.dot(wc[SL_START:SL_START + SL_SIZE, :].T, wd,
                precision=jax.lax.Precision.HIGHEST)                    # (K, 2)
    m_eff = (m[:, 0] - m[:, 1]) + (bd[0] - bd[1])                       # (K,)

    # Batch tile: whole batch for tiny B (demo), 128-row tiles when possible.
    tb = 128 if (b >= 128 and b % 128 == 0) else b
    grid = (b // tb,)

    grid_spec = pltpu.PrefetchScalarGridSpec(
        num_scalar_prefetch=0,
        grid=grid,
        in_specs=[
            pl.BlockSpec((tb, D), lambda i: (i, 0)),   # x tiles stream
            pl.BlockSpec((D, K), lambda i: (0, 0)),    # wc stays VMEM-resident
            pl.BlockSpec((1, K), lambda i: (0, 0)),    # bc resident
            pl.BlockSpec((1, K), lambda i: (0, 0)),    # m_eff resident
        ],
        out_specs=pl.BlockSpec((tb, K + 1), lambda i: (i, 0)),
    )

    return pl.pallas_call(
        _cd_kernel,
        out_shape=jax.ShapeDtypeStruct((b, K + 1), jnp.float32),
        grid_spec=grid_spec,
        compiler_params=pltpu.CompilerParams(
            dimension_semantics=("parallel",)),        # shards batch over 2 TCs on v7x
    )(x_flat, wc, bc.reshape(1, K), m_eff.reshape(1, K))


# ------------------------- pure-JAX reference ------------------------------
def cd_reference(x_nchw, wc, bc, wd, bd):
    x_flat = x_nchw.reshape(x_nchw.shape[0], -1)

    def classifier(xf):
        return xf @ wc + bc

    logits = classifier(x_flat)                                   # (B, K)

    # interpreter.get_datagrad: grad of per-sample max logit w.r.t. input
    def top_logit_sum(xf):
        return jnp.sum(jnp.max(classifier(xf), axis=1))

    sal_flat = jax.grad(top_logit_sum)(x_flat)                    # (B, D)
    sal = sal_flat.reshape(x_nchw.shape)                          # (B, C, H, W)
    sal_slice = sal[:, MAP_CHANNELS_START:MAP_CHANNELS_START + MAP_CHANNELS, :]
    det = sal_slice.reshape(sal_slice.shape[0], -1) @ wd + bd     # (B, 2)
    is_adv = det[:, 0] - det[:, 1]
    maxc = jnp.max(logits, axis=1)
    n1 = (is_adv + 1.0) * maxc
    return jnp.concatenate([logits, n1[:, None]], axis=1)


# --------------------------------- main ------------------------------------
if __name__ == "__main__":
    key = jax.random.PRNGKey(0)
    kx, kwc, kbc, kwd, kbd = jax.random.split(key, 5)

    x = jax.random.normal(kx, (B, C, H, W), dtype=jnp.float32)

    # Deterministic synthetic parameters (shapes implied by the forward pass).
    wc = 0.05 * jax.random.normal(kwc, (D, K), dtype=jnp.float32)         # classifier
    bc = 0.05 * jax.random.normal(kbc, (K,), dtype=jnp.float32)
    wd = 0.05 * jax.random.normal(kwd, (SL_SIZE, 2), dtype=jnp.float32)   # detector
    bd = 0.05 * jax.random.normal(kbd, (2,), dtype=jnp.float32)

    out = cd_forward(x, wc, bc, wd, bd)
    out = jax.block_until_ready(out)

    ref = cd_reference(x, wc, bc, wd, bd)
    assert out.shape == (B, K + 1)
    # Note: kernel uses first-argmax (torch.max) tie-breaking; differences vs.
    # jax.grad tie handling are measure-zero for continuous random inputs.
    assert jnp.allclose(out, ref, atol=2e-4, rtol=2e-4)

    print("KERNEL_OK")
</pallas_src>

<mosaic_0001>
module attributes {stable_mosaic.version = 11 : i64} {
  func.func @_cd_kernel(%arg0: i32, %arg1: memref<2x1024xf32, #tpu.memory_space<vmem>>, %arg2: memref<1024x10xf32, #tpu.memory_space<vmem>>, %arg3: memref<1x10xf32, #tpu.memory_space<vmem>>, %arg4: memref<1x10xf32, #tpu.memory_space<vmem>>, %arg5: memref<2x11xf32, #tpu.memory_space<vmem>>) attributes {dimension_semantics = [#tpu.dimension_semantics<parallel>], iteration_bounds = array<i64: 1>, scalar_prefetch = 0 : i64, scratch_operands = 0 : i64, tpu.core_type = #tpu.core_type<tc>, window_params = [{transform_indices = @transform_0, window_bounds = array<i64: 2, 1024>}, {pipeline_mode = #tpu.pipeline_mode<synchronous>, transform_indices = @transform_1, window_bounds = array<i64: 1024, 10>}, {pipeline_mode = #tpu.pipeline_mode<synchronous>, transform_indices = @transform_2, window_bounds = array<i64: 1, 10>}, {pipeline_mode = #tpu.pipeline_mode<synchronous>, transform_indices = @transform_3, window_bounds = array<i64: 1, 10>}, {transform_indices = @transform_4, window_bounds = array<i64: 2, 11>}]} {
    %c0 = arith.constant 0 : index
    %c0_0 = arith.constant 0 : index
    %0 = vector.load %arg1[%c0, %c0_0] : memref<2x1024xf32, #tpu.memory_space<vmem>>, vector<2x1024xf32>
    %c0_1 = arith.constant 0 : index
    %c0_2 = arith.constant 0 : index
    %1 = vector.load %arg2[%c0_1, %c0_2] : memref<1024x10xf32, #tpu.memory_space<vmem>>, vector<1024x10xf32>
    %cst = arith.constant dense<0.000000e+00> : vector<2x10xf32>
    %2 = tpu.matmul %0, %1, %cst {dimension_numbers = #tpu.dot_dimension_numbers<[1], [0], [0], [1], [0, 0, 1, 1], [], []>} : vector<2x1024xf32>, vector<1024x10xf32>, vector<2x10xf32> -> vector<2x10xf32>
    %c0_3 = arith.constant 0 : index
    %c0_4 = arith.constant 0 : index
    %3 = vector.load %arg3[%c0_3, %c0_4] : memref<1x10xf32, #tpu.memory_space<vmem>>, vector<1x10xf32>
    %4 = vector.broadcast %3 : vector<1x10xf32> to vector<2x10xf32>
    %5 = arith.addf %2, %4 : vector<2x10xf32>
    %cst_5 = arith.constant dense<0xFF800000> : vector<2xf32>
    %6 = vector.multi_reduction <maximumf>, %5, %cst_5 [1] : vector<2x10xf32> to vector<2xf32>
    %7 = vector.shape_cast %6 : vector<2xf32> to vector<2x1xf32>
    %8 = tpu.iota {dimensions = array<i32: 1>} : vector<2x10xi32>
    %9 = vector.broadcast %7 : vector<2x1xf32> to vector<2x10xf32>
    %10 = arith.cmpf oeq, %5, %9 : vector<2x10xf32>
    %c10_i32 = arith.constant 10 : i32
    %11 = vector.broadcast %c10_i32 : i32 to vector<2x10xi32>
    %12 = arith.select %10, %8, %11 : vector<2x10xi1>, vector<2x10xi32>
    %cst_6 = arith.constant dense<2147483647> : vector<2xi32>
    %13 = vector.multi_reduction <minsi>, %12, %cst_6 [1] : vector<2x10xi32> to vector<2xi32>
    %14 = vector.shape_cast %13 : vector<2xi32> to vector<2x1xi32>
    %15 = vector.broadcast %14 : vector<2x1xi32> to vector<2x10xi32>
    %16 = arith.cmpi eq, %8, %15 : vector<2x10xi32>
    %17 = arith.extui %16 : vector<2x10xi1> to vector<2x10xi32>
    %18 = arith.sitofp %17 : vector<2x10xi32> to vector<2x10xf32>
    %c0_7 = arith.constant 0 : index
    %c0_8 = arith.constant 0 : index
    %19 = vector.load %arg4[%c0_7, %c0_8] : memref<1x10xf32, #tpu.memory_space<vmem>>, vector<1x10xf32>
    %20 = vector.broadcast %19 : vector<1x10xf32> to vector<2x10xf32>
    %21 = arith.mulf %18, %20 : vector<2x10xf32>
    %cst_9 = arith.constant dense<0.000000e+00> : vector<2xf32>
    %22 = vector.multi_reduction <add>, %21, %cst_9 [1] : vector<2x10xf32> to vector<2xf32>
    %23 = vector.shape_cast %22 : vector<2xf32> to vector<2x1xf32>
    %cst_10 = arith.constant 1.000000e+00 : f32
    %24 = vector.broadcast %cst_10 : f32 to vector<2x1xf32>
    %25 = arith.addf %23, %24 : vector<2x1xf32>
    %26 = arith.mulf %25, %7 : vector<2x1xf32>
    %27 = tpu.concatenate %5, %26 in 1 : vector<2x10xf32>, vector<2x1xf32> -> vector<2x11xf32>
    %c0_11 = arith.constant 0 : index
    %c0_12 = arith.constant 0 : index
    %28 = vector.load %arg5[%c0_11, %c0_12] : memref<2x11xf32, #tpu.memory_space<vmem>>, vector<2x11xf32>
    tpu.vector_store %arg5[%c0_11, %c0_12], %27 {strides = array<i32>} : memref<2x11xf32, #tpu.memory_space<vmem>>, vector<2x11xf32>,
    return
  }
  func.func @transform_0(%arg0: i32) -> (i32, i32) {
    %c0_i32 = arith.constant 0 : i32
    %c0_i32_0 = arith.constant 0 : i32
    return %arg0, %c0_i32 : i32, i32
  }
  func.func @transform_1(%arg0: i32) -> (i32, i32) {
    %c0_i32 = arith.constant 0 : i32
    %c0_i32_0 = arith.constant 0 : i32
    %c0_i32_1 = arith.constant 0 : i32
    return %c0_i32, %c0_i32_0 : i32, i32
  }
  func.func @transform_2(%arg0: i32) -> (i32, i32) {
    %c0_i32 = arith.constant 0 : i32
    %c0_i32_0 = arith.constant 0 : i32
    %c0_i32_1 = arith.constant 0 : i32
    return %c0_i32, %c0_i32_0 : i32, i32
  }
  func.func @transform_3(%arg0: i32) -> (i32, i32) {
    %c0_i32 = arith.constant 0 : i32
    %c0_i32_0 = arith.constant 0 : i32
    %c0_i32_1 = arith.constant 0 : i32
    return %c0_i32, %c0_i32_0 : i32, i32
  }
  func.func @transform_4(%arg0: i32) -> (i32, i32) {
    %c0_i32 = arith.constant 0 : i32
    %c0_i32_0 = arith.constant 0 : i32
    return %arg0, %c0_i32 : i32, i32
  }
}

</mosaic_0001>

<llo_original>
// kernel: cd_forward.1
$region0: #{cd_forward.1}
  #allocation0 [shape = 'u32[]', space=smem, size = 0x4, offset = 0x4, fixed_abs, tag = 'smem constant byte address 0x4 - core index']
  #allocation1 [shape = 'u32[144,128]{1,0:T(1,128)}', space=vmem, size = 0x12000, scoped, tag = 'internal scratch']
  %s0 = inlined_call_operand.vmem [shape: f32[2,1024], index: 0, kind: input, shape index: {}]
  %s1 = inlined_call_operand.vmem [shape: f32[1024,10], index: 1, kind: input, shape index: {}]
  %s2 = inlined_call_operand.vmem [shape: f32[1,10], index: 2, kind: input, shape index: {}]
  %s3 = inlined_call_operand.vmem [shape: f32[1,10], index: 3, kind: input, shape index: {}]
  %s4 = inlined_call_operand.hbm [shape: f32[2,11], index: 4, kind: output, shape index: {}]
  %s5 = sld [smem:[#allocation0]]
  $region26: #{cd_forward.1} parent=0
    _
  %s7 = ssub.s32 1, %s5
  %s8 = scalar_select 0, %s7, %s5
  $region1: #{cd_forward.1} parent=0
    #allocation2 [shape = 'u8[1024]{0}', space=vmem, size = 0x400, scoped, tag = 'output window, operand 0, single buffered']
    #allocation3 [shape = 's32[1]{0}', space=sflag, size = 0x4, scoped, tag = 'scoped memory for cd_forward.1']
    %9 = vsyncpa [#allocation3], 0
    // Predicated region
    $region2: #{cd_forward.1} parent=1 // pred_check
      _
    $region3: #{cd_forward.1} parent=1 // pred_check_branch
      %11 = sbr.rel (0) target = $region5
    $region4: #{cd_forward.1} parent=1 // pred_region
      _
    $region5: #{cd_forward.1} parent=1 // pred_fallthru
      _
    // Predicated region
    $region6: #{cd_forward.1} parent=1 // pred_check
      _
    $region7: #{cd_forward.1} parent=1 // pred_check_branch
      %13 = sbr.rel (0) target = $region9
    $region8: #{cd_forward.1} parent=1 // pred_region
      _
    $region9: #{cd_forward.1} parent=1 // pred_fallthru
      _
    // Predicated region
    $region10: #{cd_forward.1} parent=1 // pred_check
      _
    $region11: #{cd_forward.1} parent=1 // pred_check_branch
      %15 = sbr.rel (0) target = $region13
    $region12: #{cd_forward.1} parent=1 // pred_region
      _
    $region13: #{cd_forward.1} parent=1 // pred_fallthru
      _
    // Predicated region
    $region14: #{cd_forward.1} parent=1 // pred_check
      _
    $region15: #{cd_forward.1} parent=1 // pred_check_branch
      %17 = sbr.rel (0) target = $region17
    $region16: #{cd_forward.1} parent=1 // pred_region
      _
    $region17: #{cd_forward.1} parent=1 // pred_fallthru
      _
    %v18 = vld [vmem:[%s0] sm:$0xff]
    %v19 = vld [vmem:[%s0 + $0x8] sm:$0xff]
    %v20 = vld [vmem:[%s1] sm:$0xff]
    %v21 = vld [vmem:[%s1 + $0x8] sm:$0xff]
    %v22 = vld [vmem:[%s1 + $0x10] sm:$0xff]
    %v23 = vld [vmem:[%s1 + $0x18] sm:$0xff]
    %v24 = vld [vmem:[%s1 + $0x20] sm:$0xff]
    %v25 = vld [vmem:[%s1 + $0x28] sm:$0xff]
    %v26 = vld [vmem:[%s1 + $0x30] sm:$0xff]
    %v27 = vld [vmem:[%s1 + $0x38] sm:$0xff]
    %v28 = vld [vmem:[%s1 + $0x40] sm:$0xff]
    %v29 = vld [vmem:[%s1 + $0x48] sm:$0xff]
    %v30 = vld [vmem:[%s1 + $0x50] sm:$0xff]
    %v31 = vld [vmem:[%s1 + $0x58] sm:$0xff]
    %v32 = vld [vmem:[%s1 + $0x60] sm:$0xff]
    %v33 = vld [vmem:[%s1 + $0x68] sm:$0xff]
    %v34 = vld [vmem:[%s1 + $0x70] sm:$0xff]
    %v35 = vld [vmem:[%s1 + $0x78] sm:$0xff]
    %v36 = vld [vmem:[%s1 + $0x80] sm:$0xff]
    %v37 = vld [vmem:[%s1 + $0x88] sm:$0xff]
    %v38 = vld [vmem:[%s1 + $0x90] sm:$0xff]
    %v39 = vld [vmem:[%s1 + $0x98] sm:$0xff]
    %v40 = vld [vmem:[%s1 + $0xa0] sm:$0xff]
    %v41 = vld [vmem:[%s1 + $0xa8] sm:$0xff]
    %v42 = vld [vmem:[%s1 + $0xb0] sm:$0xff]
    %v43 = vld [vmem:[%s1 + $0xb8] sm:$0xff]
    %v44 = vld [vmem:[%s1 + $0xc0] sm:$0xff]
    %v45 = vld [vmem:[%s1 + $0xc8] sm:$0xff]
    %v46 = vld [vmem:[%s1 + $0xd0] sm:$0xff]
    %v47 = vld [vmem:[%s1 + $0xd8] sm:$0xff]
    %v48 = vld [vmem:[%s1 + $0xe0] sm:$0xff]
    %v49 = vld [vmem:[%s1 + $0xe8] sm:$0xff]
    %v50 = vld [vmem:[%s1 + $0xf0] sm:$0xff]
    %v51 = vld [vmem:[%s1 + $0xf8] sm:$0xff]
    %v52 = vld [vmem:[%s1 + $0x100] sm:$0xff]
    %v53 = vld [vmem:[%s1 + $0x108] sm:$0xff]
    %v54 = vld [vmem:[%s1 + $0x110] sm:$0xff]
    %v55 = vld [vmem:[%s1 + $0x118] sm:$0xff]
    %v56 = vld [vmem:[%s1 + $0x120] sm:$0xff]
    %v57 = vld [vmem:[%s1 + $0x128] sm:$0xff]
    %v58 = vld [vmem:[%s1 + $0x130] sm:$0xff]
    %v59 = vld [vmem:[%s1 + $0x138] sm:$0xff]
    %v60 = vld [vmem:[%s1 + $0x140] sm:$0xff]
    %v61 = vld [vmem:[%s1 + $0x148] sm:$0xff]
    %v62 = vld [vmem:[%s1 + $0x150] sm:$0xff]
    %v63 = vld [vmem:[%s1 + $0x158] sm:$0xff]
    %v64 = vld [vmem:[%s1 + $0x160] sm:$0xff]
    %v65 = vld [vmem:[%s1 + $0x168] sm:$0xff]
    %v66 = vld [vmem:[%s1 + $0x170] sm:$0xff]
    %v67 = vld [vmem:[%s1 + $0x178] sm:$0xff]
    %v68 = vld [vmem:[%s1 + $0x180] sm:$0xff]
    %v69 = vld [vmem:[%s1 + $0x188] sm:$0xff]
    %v70 = vld [vmem:[%s1 + $0x190] sm:$0xff]
    %v71 = vld [vmem:[%s1 + $0x198] sm:$0xff]
    %v72 = vld [vmem:[%s1 + $0x1a0] sm:$0xff]
    %v73 = vld [vmem:[%s1 + $0x1a8] sm:$0xff]
    %v74 = vld [vmem:[%s1 + $0x1b0] sm:$0xff]
    %v75 = vld [vmem:[%s1 + $0x1b8] sm:$0xff]
    %v76 = vld [vmem:[%s1 + $0x1c0] sm:$0xff]
    %v77 = vld [vmem:[%s1 + $0x1c8] sm:$0xff]
    %v78 = vld [vmem:[%s1 + $0x1d0] sm:$0xff]
    %v79 = vld [vmem:[%s1 + $0x1d8] sm:$0xff]
    %v80 = vld [vmem:[%s1 + $0x1e0] sm:$0xff]
    %v81 = vld [vmem:[%s1 + $0x1e8] sm:$0xff]
    %v82 = vld [vmem:[%s1 + $0x1f0] sm:$0xff]
    %v83 = vld [vmem:[%s1 + $0x1f8] sm:$0xff]
    %v84 = vld [vmem:[%s1 + $0x200] sm:$0xff]
    %v85 = vld [vmem:[%s1 + $0x208] sm:$0xff]
    %v86 = vld [vmem:[%s1 + $0x210] sm:$0xff]
    %v87 = vld [vmem:[%s1 + $0x218] sm:$0xff]
    %v88 = vld [vmem:[%s1 + $0x220] sm:$0xff]
    %v89 = vld [vmem:[%s1 + $0x228] sm:$0xff]
    %v90 = vld [vmem:[%s1 + $0x230] sm:$0xff]
    %v91 = vld [vmem:[%s1 + $0x238] sm:$0xff]
    %v92 = vld [vmem:[%s1 + $0x240] sm:$0xff]
    %v93 = vld [vmem:[%s1 + $0x248] sm:$0xff]
    %v94 = vld [vmem:[%s1 + $0x250] sm:$0xff]
    %v95 = vld [vmem:[%s1 + $0x258] sm:$0xff]
    %v96 = vld [vmem:[%s1 + $0x260] sm:$0xff]
    %v97 = vld [vmem:[%s1 + $0x268] sm:$0xff]
    %v98 = vld [vmem:[%s1 + $0x270] sm:$0xff]
    %v99 = vld [vmem:[%s1 + $0x278] sm:$0xff]
    %v100 = vld [vmem:[%s1 + $0x280] sm:$0xff]
    %v101 = vld [vmem:[%s1 + $0x288] sm:$0xff]
    %v102 = vld [vmem:[%s1 + $0x290] sm:$0xff]
    %v103 = vld [vmem:[%s1 + $0x298] sm:$0xff]
    %v104 = vld [vmem:[%s1 + $0x2a0] sm:$0xff]
    %v105 = vld [vmem:[%s1 + $0x2a8] sm:$0xff]
    %v106 = vld [vmem:[%s1 + $0x2b0] sm:$0xff]
    %v107 = vld [vmem:[%s1 + $0x2b8] sm:$0xff]
    %v108 = vld [vmem:[%s1 + $0x2c0] sm:$0xff]
    %v109 = vld [vmem:[%s1 + $0x2c8] sm:$0xff]
    %v110 = vld [vmem:[%s1 + $0x2d0] sm:$0xff]
    %v111 = vld [vmem:[%s1 + $0x2d8] sm:$0xff]
    %v112 = vld [vmem:[%s1 + $0x2e0] sm:$0xff]
    %v113 = vld [vmem:[%s1 + $0x2e8] sm:$0xff]
    %v114 = vld [vmem:[%s1 + $0x2f0] sm:$0xff]
    %v115 = vld [vmem:[%s1 + $0x2f8] sm:$0xff]
    %v116 = vld [vmem:[%s1 + $0x300] sm:$0xff]
    %v117 = vld [vmem:[%s1 + $0x308] sm:$0xff]
    %v118 = vld [vmem:[%s1 + $0x310] sm:$0xff]
    %v119 = vld [vmem:[%s1 + $0x318] sm:$0xff]
    %v120 = vld [vmem:[%s1 + $0x320] sm:$0xff]
    %v121 = vld [vmem:[%s1 + $0x328] sm:$0xff]
    %v122 = vld [vmem:[%s1 + $0x330] sm:$0xff]
    %v123 = vld [vmem:[%s1 + $0x338] sm:$0xff]
    %v124 = vld [vmem:[%s1 + $0x340] sm:$0xff]
    %v125 = vld [vmem:[%s1 + $0x348] sm:$0xff]
    %v126 = vld [vmem:[%s1 + $0x350] sm:$0xff]
    %v127 = vld [vmem:[%s1 + $0x358] sm:$0xff]
    %v128 = vld [vmem:[%s1 + $0x360] sm:$0xff]
    %v129 = vld [vmem:[%s1 + $0x368] sm:$0xff]
    %v130 = vld [vmem:[%s1 + $0x370] sm:$0xff]
    %v131 = vld [vmem:[%s1 + $0x378] sm:$0xff]
    %v132 = vld [vmem:[%s1 + $0x380] sm:$0xff]
    %v133 = vld [vmem:[%s1 + $0x388] sm:$0xff]
    %v134 = vld [vmem:[%s1 + $0x390] sm:$0xff]
    %v135 = vld [vmem:[%s1 + $0x398] sm:$0xff]
    %v136 = vld [vmem:[%s1 + $0x3a0] sm:$0xff]
    %v137 = vld [vmem:[%s1 + $0x3a8] sm:$0xff]
    %v138 = vld [vmem:[%s1 + $0x3b0] sm:$0xff]
    %v139 = vld [vmem:[%s1 + $0x3b8] sm:$0xff]
    %v140 = vld [vmem:[%s1 + $0x3c0] sm:$0xff]
    %v141 = vld [vmem:[%s1 + $0x3c8] sm:$0xff]
    %v142 = vld [vmem:[%s1 + $0x3d0] sm:$0xff]
    %v143 = vld [vmem:[%s1 + $0x3d8] sm:$0xff]
    %v144 = vld [vmem:[%s1 + $0x3e0] sm:$0xff]
    %v145 = vld [vmem:[%s1 + $0x3e8] sm:$0xff]
    %v146 = vld [vmem:[%s1 + $0x3f0] sm:$0xff]
    %v147 = vld [vmem:[%s1 + $0x3f8] sm:$0xff]
    %v148 = vld [vmem:[%s2] sm:$0x1]
    %v150 = vlaneseq
    %v151 = vshrl.u32 %v150, 7
    %v152 = vsub.s32 0, %v151
    %v153 = vrot.slane %v148, %v152
    %v157 = vcombine.high %v18, %v18
    %v159 = vunpack.c.l.s4 1983009808
    %v160 = vunpack.c.0.s8 %v159
    %v161 = vlaneseq
    %v162 = vshrl.u32 %v161, 7
    %v163 = vsub.s32 %v160, %v162
    %v164 = vrot.slane %v18, %v163
    %v166 = vunpack.c.l.s4 1983009808
    %v167 = vunpack.c.0.s8 %v166
    %v168 = vlaneseq
    %v169 = vshrl.u32 %v168, 7
    %v170 = vsub.s32 %v167, %v169
    %v171 = vrot.slane %v157, %v170
    %v172 = vcombine.high %v164, %v164
    %v173 = vcombine.high %v171, %v171
    %v174 = vcombine.high %v19, %v19
    %v176 = vunpack.c.l.s4 1983009808
    %v177 = vunpack.c.0.s8 %v176
    %v178 = vlaneseq
    %v179 = vshrl.u32 %v178, 7
    %v180 = vsub.s32 %v177, %v179
    %v181 = vrot.slane %v19, %v180
    %v183 = vunpack.c.l.s4 1983009808
    %v184 = vunpack.c.0.s8 %v183
    %v185 = vlaneseq
    %v186 = vshrl.u32 %v185, 7
    %v187 = vsub.s32 %v184, %v186
    %v188 = vrot.slane %v174, %v187
    %v189 = vcombine.high %v181, %v181
    %v190 = vcombine.high %v188, %v188
    %199 = vmatprep.subr.mxu0 0.0
    %200 = vmatpush1.msra.mxu0 %v20
    %201 = vmatprep.subr.mxu0 0.0
    %202 = vmatpush1.msra.mxu0 %v21
    %203 = vmatprep.subr.mxu0 0.0
    %204 = vmatpush1.msra.mxu0 %v22
    %205 = vmatprep.subr.mxu0 0.0
    %206 = vmatpush1.msra.mxu0 %v23
    %207 = vmatprep.subr.mxu0 0.0
    %208 = vmatpush1.msra.mxu0 %v24
    %209 = vmatprep.subr.mxu0 0.0
    %210 = vmatpush1.msra.mxu0 %v25
    %211 = vmatprep.subr.mxu0 0.0
    %212 = vmatpush1.msra.mxu0 %v26
    %213 = vmatprep.subr.mxu0 0.0
    %214 = vmatpush1.msra.mxu0 %v27
    %215 = vmatprep.subr.mxu0 0.0
    %216 = vmatpush1.msra.mxu0 %v28
    %217 = vmatprep.subr.mxu0 0.0
    %218 = vmatpush1.msra.mxu0 %v29
    %219 = vmatprep.subr.mxu0 0.0
    %220 = vmatpush1.msra.mxu0 %v30
    %221 = vmatprep.subr.mxu0 0.0
    %222 = vmatpush1.msra.mxu0 %v31
    %223 = vmatprep.subr.mxu0 0.0
    %224 = vmatpush1.msra.mxu0 %v32
    %225 = vmatprep.subr.mxu0 0.0
    %226 = vmatpush1.msra.mxu0 %v33
    %227 = vmatprep.subr.mxu0 0.0
    %228 = vmatpush1.msra.mxu0 %v34
    %229 = vmatprep.subr.mxu0 0.0
    %230 = vmatpush1.msra.mxu0 %v35
    %231 = vmatprep.subr.mxu0 0.0
    %232 = vmatpush1.msra.mxu0 %v36
    %233 = vmatprep.subr.mxu0 0.0
    %234 = vmatpush1.msra.mxu0 %v37
    %235 = vmatprep.subr.mxu0 0.0
    %236 = vmatpush1.msra.mxu0 %v38
    %237 = vmatprep.subr.mxu0 0.0
    %238 = vmatpush1.msra.mxu0 %v39
    %239 = vmatprep.subr.mxu0 0.0
    %240 = vmatpush1.msra.mxu0 %v40
    %241 = vmatprep.subr.mxu0 0.0
    %242 = vmatpush1.msra.mxu0 %v41
    %243 = vmatprep.subr.mxu0 0.0
    %244 = vmatpush1.msra.mxu0 %v42
    %245 = vmatprep.subr.mxu0 0.0
    %246 = vmatpush1.msra.mxu0 %v43
    %247 = vmatprep.subr.mxu0 0.0
    %248 = vmatpush1.msra.mxu0 %v44
    %249 = vmatprep.subr.mxu0 0.0
    %250 = vmatpush1.msra.mxu0 %v45
    %251 = vmatprep.subr.mxu0 0.0
    %252 = vmatpush1.msra.mxu0 %v46
    %253 = vmatprep.subr.mxu0 0.0
    %254 = vmatpush1.msra.mxu0 %v47
    %255 = vmatprep.subr.mxu0 0.0
    %256 = vmatpush1.msra.mxu0 %v48
    %257 = vmatprep.subr.mxu0 0.0
    %258 = vmatpush1.msra.mxu0 %v49
    %259 = vmatprep.subr.mxu0 0.0
    %260 = vmatpush1.msra.mxu0 %v50
    %261 = vmatprep.subr.mxu0 0.0
    %262 = vmatpush1.msra.mxu0 %v51
    %263 = vmatprep.mubr.f32.mxu0 %v172
    %264 = vmatmul.mubr.f32.gmra.mrb[0].mxu0 %v164
    %v265 = vpop.f32.mrb[0].mxu0
    %v266 = vadd.f32 %v153, %v265
    %v267 = vpop.f32.mrb[0].mxu0
    %268 = vdwg.mxu0
    %269 = vmatprep.subr.mxu0 0.0
    %270 = vmatpush1.msra.mxu0 %v52
    %271 = vmatprep.subr.mxu0 0.0
    %272 = vmatpush1.msra.mxu0 %v53
    %273 = vmatprep.subr.mxu0 0.0
    %274 = vmatpush1.msra.mxu0 %v54
    %275 = vmatprep.subr.mxu0 0.0
    %276 = vmatpush1.msra.mxu0 %v55
    %277 = vmatprep.subr.mxu0 0.0
    %278 = vmatpush1.msra.mxu0 %v56
    %279 = vmatprep.subr.mxu0 0.0
    %280 = vmatpush1.msra.mxu0 %v57
    %281 = vmatprep.subr.mxu0 0.0
    %282 = vmatpush1.msra.mxu0 %v58
    %283 = vmatprep.subr.mxu0 0.0
    %284 = vmatpush1.msra.mxu0 %v59
    %285 = vmatprep.subr.mxu0 0.0
    %286 = vmatpush1.msra.mxu0 %v60
    %287 = vmatprep.subr.mxu0 0.0
    %288 = vmatpush1.msra.mxu0 %v61
    %289 = vmatprep.subr.mxu0 0.0
    %290 = vmatpush1.msra.mxu0 %v62
    %291 = vmatprep.subr.mxu0 0.0
    %292 = vmatpush1.msra.mxu0 %v63
    %293 = vmatprep.subr.mxu0 0.0
    %294 = vmatpush1.msra.mxu0 %v64
    %295 = vmatprep.subr.mxu0 0.0
    %296 = vmatpush1.msra.mxu0 %v65
    %297 = vmatprep.subr.mxu0 0.0
    %298 = vmatpush1.msra.mxu0 %v66
    %299 = vmatprep.subr.mxu0 0.0
    %300 = vmatpush1.msra.mxu0 %v67
    %301 = vmatprep.subr.mxu0 0.0
    %302 = vmatpush1.msra.mxu0 %v68
    %303 = vmatprep.subr.mxu0 0.0
    %304 = vmatpush1.msra.mxu0 %v69
    %305 = vmatprep.subr.mxu0 0.0
    %306 = vmatpush1.msra.mxu0 %v70
    %307 = vmatprep.subr.mxu0 0.0
    %308 = vmatpush1.msra.mxu0 %v71
    %309 = vmatprep.subr.mxu0 0.0
    %310 = vmatpush1.msra.mxu0 %v72
    %311 = vmatprep.subr.mxu0 0.0
    %312 = vmatpush1.msra.mxu0 %v73
    %313 = vmatprep.subr.mxu0 0.0
    %314 = vmatpush1.msra.mxu0 %v74
    %315 = vmatprep.subr.mxu0 0.0
    %316 = vmatpush1.msra.mxu0 %v75
    %317 = vmatprep.subr.mxu0 0.0
    %318 = vmatpush1.msra.mxu0 %v76
    %319 = vmatprep.subr.mxu0 0.0
    %320 = vmatpush1.msra.mxu0 %v77
    %321 = vmatprep.subr.mxu0 0.0
    %322 = vmatpush1.msra.mxu0 %v78
    %323 = vmatprep.subr.mxu0 0.0
    %324 = vmatpush1.msra.mxu0 %v79
    %325 = vmatprep.subr.mxu0 0.0
    %326 = vmatpush1.msra.mxu0 %v80
    %327 = vmatprep.subr.mxu0 0.0
    %328 = vmatpush1.msra.mxu0 %v81
    %329 = vmatprep.subr.mxu0 0.0
    %330 = vmatpush1.msra.mxu0 %v82
    %331 = vmatprep.subr.mxu0 0.0
    %332 = vmatpush1.msra.mxu0 %v83
    %333 = vmatprep.mubr.f32.mxu0 %v173
    %334 = vmatmul.mubr.f32.gmra.mrb[0].mxu0 %v171
    %v335 = vpop.f32.mrb[0].mxu0
    %v336 = vadd.f32 %v266, %v335
    %v337 = vpop.f32.mrb[0].mxu0
    %338 = vdwg.mxu0
    %339 = vmatprep.subr.mxu0 0.0
    %340 = vmatpush1.msra.mxu0 %v84
    %341 = vmatprep.subr.mxu0 0.0
    %342 = vmatpush1.msra.mxu0 %v85
    %343 = vmatprep.subr.mxu0 0.0
    %344 = vmatpush1.msra.mxu0 %v86
    %345 = vmatprep.subr.mxu0 0.0
    %346 = vmatpush1.msra.mxu0 %v87
    %347 = vmatprep.subr.mxu0 0.0
    %348 = vmatpush1.msra.mxu0 %v88
    %349 = vmatprep.subr.mxu0 0.0
    %350 = vmatpush1.msra.mxu0 %v89
    %351 = vmatprep.subr.mxu0 0.0
    %352 = vmatpush1.msra.mxu0 %v90
    %353 = vmatprep.subr.mxu0 0.0
    %354 = vmatpush1.msra.mxu0 %v91
    %355 = vmatprep.subr.mxu0 0.0
    %356 = vmatpush1.msra.mxu0 %v92
    %357 = vmatprep.subr.mxu0 0.0
    %358 = vmatpush1.msra.mxu0 %v93
    %359 = vmatprep.subr.mxu0 0.0
    %360 = vmatpush1.msra.mxu0 %v94
    %361 = vmatprep.subr.mxu0 0.0
    %362 = vmatpush1.msra.mxu0 %v95
    %363 = vmatprep.subr.mxu0 0.0
    %364 = vmatpush1.msra.mxu0 %v96
    %365 = vmatprep.subr.mxu0 0.0
    %366 = vmatpush1.msra.mxu0 %v97
    %367 = vmatprep.subr.mxu0 0.0
    %368 = vmatpush1.msra.mxu0 %v98
    %369 = vmatprep.subr.mxu0 0.0
    %370 = vmatpush1.msra.mxu0 %v99
    %371 = vmatprep.subr.mxu0 0.0
    %372 = vmatpush1.msra.mxu0 %v100
    %373 = vmatprep.subr.mxu0 0.0
    %374 = vmatpush1.msra.mxu0 %v101
    %375 = vmatprep.subr.mxu0 0.0
    %376 = vmatpush1.msra.mxu0 %v102
    %377 = vmatprep.subr.mxu0 0.0
    %378 = vmatpush1.msra.mxu0 %v103
    %379 = vmatprep.subr.mxu0 0.0
    %380 = vmatpush1.msra.mxu0 %v104
    %381 = vmatprep.subr.mxu0 0.0
    %382 = vmatpush1.msra.mxu0 %v105
    %383 = vmatprep.subr.mxu0 0.0
    %384 = vmatpush1.msra.mxu0 %v106
    %385 = vmatprep.subr.mxu0 0.0
    %386 = vmatpush1.msra.mxu0 %v107
    %387 = vmatprep.subr.mxu0 0.0
    %388 = vmatpush1.msra.mxu0 %v108
    %389 = vmatprep.subr.mxu0 0.0
    %390 = vmatpush1.msra.mxu0 %v109
    %391 = vmatprep.subr.mxu0 0.0
    %392 = vmatpush1.msra.mxu0 %v110
    %393 = vmatprep.subr.mxu0 0.0
    %394 = vmatpush1.msra.mxu0 %v111
    %395 = vmatprep.subr.mxu0 0.0
    %396 = vmatpush1.msra.mxu0 %v112
    %397 = vmatprep.subr.mxu0 0.0
    %398 = vmatpush1.msra.mxu0 %v113
    %399 = vmatprep.subr.mxu0 0.0
    %400 = vmatpush1.msra.mxu0 %v114
    %401 = vmatprep.subr.mxu0 0.0
    %402 = vmatpush1.msra.mxu0 %v115
    %403 = vmatprep.mubr.f32.mxu0 %v189
    %404 = vmatmul.mubr.f32.gmra.mrb[0].mxu0 %v181
    %v405 = vpop.f32.mrb[0].mxu0
    %v406 = vadd.f32 %v336, %v405
    %v407 = vpop.f32.mrb[0].mxu0
    %408 = vdwg.mxu0
    %409 = vmatprep.subr.mxu0 0.0
    %410 = vmatpush1.msra.mxu0 %v116
    %411 = vmatprep.subr.mxu0 0.0
    %412 = vmatpush1.msra.mxu0 %v117
    %413 = vmatprep.subr.mxu0 0.0
    %414 = vmatpush1.msra.mxu0 %v118
    %415 = vmatprep.subr.mxu0 0.0
    %416 = vmatpush1.msra.mxu0 %v119
    %417 = vmatprep.subr.mxu0 0.0
    %418 = vmatpush1.msra.mxu0 %v120
    %419 = vmatprep.subr.mxu0 0.0
    %420 = vmatpush1.msra.mxu0 %v121
    %421 = vmatprep.subr.mxu0 0.0
    %422 = vmatpush1.msra.mxu0 %v122
    %423 = vmatprep.subr.mxu0 0.0
    %424 = vmatpush1.msra.mxu0 %v123
    %425 = vmatprep.subr.mxu0 0.0
    %426 = vmatpush1.msra.mxu0 %v124
    %427 = vmatprep.subr.mxu0 0.0
    %428 = vmatpush1.msra.mxu0 %v125
    %429 = vmatprep.subr.mxu0 0.0
    %430 = vmatpush1.msra.mxu0 %v126
    %431 = vmatprep.subr.mxu0 0.0
    %432 = vmatpush1.msra.mxu0 %v127
    %433 = vmatprep.subr.mxu0 0.0
    %434 = vmatpush1.msra.mxu0 %v128
    %435 = vmatprep.subr.mxu0 0.0
    %436 = vmatpush1.msra.mxu0 %v129
    %437 = vmatprep.subr.mxu0 0.0
    %438 = vmatpush1.msra.mxu0 %v130
    %439 = vmatprep.subr.mxu0 0.0
    %440 = vmatpush1.msra.mxu0 %v131
    %441 = vmatprep.subr.mxu0 0.0
    %442 = vmatpush1.msra.mxu0 %v132
    %443 = vmatprep.subr.mxu0 0.0
    %444 = vmatpush1.msra.mxu0 %v133
    %445 = vmatprep.subr.mxu0 0.0
    %446 = vmatpush1.msra.mxu0 %v134
    %447 = vmatprep.subr.mxu0 0.0
    %448 = vmatpush1.msra.mxu0 %v135
    %449 = vmatprep.subr.mxu0 0.0
    %450 = vmatpush1.msra.mxu0 %v136
    %451 = vmatprep.subr.mxu0 0.0
    %452 = vmatpush1.msra.mxu0 %v137
    %453 = vmatprep.subr.mxu0 0.0
    %454 = vmatpush1.msra.mxu0 %v138
    %455 = vmatprep.subr.mxu0 0.0
    %456 = vmatpush1.msra.mxu0 %v139
    %457 = vmatprep.subr.mxu0 0.0
    %458 = vmatpush1.msra.mxu0 %v140
    %459 = vmatprep.subr.mxu0 0.0
    %460 = vmatpush1.msra.mxu0 %v141
    %461 = vmatprep.subr.mxu0 0.0
    %462 = vmatpush1.msra.mxu0 %v142
    %463 = vmatprep.subr.mxu0 0.0
    %464 = vmatpush1.msra.mxu0 %v143
    %465 = vmatprep.subr.mxu0 0.0
    %466 = vmatpush1.msra.mxu0 %v144
    %467 = vmatprep.subr.mxu0 0.0
    %468 = vmatpush1.msra.mxu0 %v145
    %469 = vmatprep.subr.mxu0 0.0
    %470 = vmatpush1.msra.mxu0 %v146
    %471 = vmatprep.subr.mxu0 0.0
    %472 = vmatpush1.msra.mxu0 %v147
    %473 = vmatprep.mubr.f32.mxu0 %v190
    %474 = vmatmul.mubr.f32.gmra.mrb[0].mxu0 %v188
    %v475 = vpop.f32.mrb[0].mxu0
    %v476 = vadd.f32 %v406, %v475
    %v477 = vpop.f32.mrb[0].mxu0
    %478 = vdwg.mxu0
    %vm479 = vcmask 74752
    %v480 = vsel %vm479, %v476, -inf
    %481 = vmax.xlane.f32.xlu0 %v480
    %v482 = vpop.xlane.xlu0 %481
    %v483 = vlaneseq
    %v484 = vand.u32 %v483, 127
    %vm485 = vcmp.eq.f32.partialorder %v476, %v482
    %v486 = vsel %vm485, %v484, 10
    %v487 = vsel %vm479, %v486, 2147483647
    %v488 = vand.u32 %v487, 65535
    %v489 = vshra.s32 %v487, 16
    %v490 = vcvt.s32.f32 %v488
    %v491 = vcvt.s32.f32 %v489
    %492 = vmin.xlane.f32.xlu0 %v491
    %v493 = vpop.xlane.xlu0 %492
    %vm494 = vcmp.eq.f32.partialorder %v491, %v493
    %v495 = vsel %vm494, %v490, inf
    %496 = vmin.xlane.f32.xlu0 %v495
    %v497 = vpop.xlane.xlu0 %496
    %v498 = vcvt.f32.s32 %v497
    %v499 = vcvt.f32.s32 %v493
    %v500 = vshll.u32 %v499, 16
    %v501 = vadd.s32 %v500, %v498
    %vm502 = vcmp.eq.s32.totalorder %v484, %v501
    %v503 = vsel %vm502, 1, 0
    %v504 = vcvt.s32.f32 %v503
    %v505 = vld [vmem:[%s3] sm:$0x1]
    %v507 = vlaneseq
    %v508 = vshrl.u32 %v507, 7
    %v509 = vsub.s32 0, %v508
    %v510 = vrot.slane %v505, %v509
    %v512 = vmul.f32 %v504, %v510
    %v513 = vsel %vm479, %v512, 0.0
    %514 = vadd.xlane.f32.xlu0 %v513
    %v515 = vpop.xlane.xlu0 %514
    %v516 = vadd.f32 %v515, 1.0
    %v517 = vmul.f32 %v516, %v482
    %vm518 = vcmask 80896
    %v519 = vsel %vm518, %v476, %v517
    %vm520 = vcmask 82944
    %521 = vst.msk [vmem:[#allocation2] sm:$0x3] %vm520, %v519
    // Predicated region
    $region18: #{cd_forward.1} parent=1 // pred_check
      _
    $region19: #{cd_forward.1} parent=1 // pred_check_branch
      %523 = sbr.rel (0) target = $region21
    $region20: #{cd_forward.1} parent=1 // pred_region
      %s525 = ssub.s32 32, 32
      %526 = vsyncadd [#allocation3], %s525
      %s528 = sshll.u32 [#allocation2], 4
      %s529 = int_to_ptr.vmem [resolvable:$true] %s528
      %531 = dma.vmem_to_hbm [thread:$0]  %s529, 32, %s4, [#allocation3]
    $region21: #{cd_forward.1} parent=1 // pred_fallthru
      _
    // Predicated region
    $region22: #{cd_forward.1} parent=1 // pred_check
      _
    $region23: #{cd_forward.1} parent=1 // pred_check_branch
      %533 = sbr.rel (0) target = $region25
    $region24: #{cd_forward.1} parent=1 // pred_region
      %534 = dma.done [#allocation3], 32
    $region25: #{cd_forward.1} parent=1 // pred_fallthru
      _
    %535 = vsyncpa [#allocation3], 1

</llo_original>
